<compile_context>
chip_gen: v7x
topology: tpu7x:2x2x1
jax: 0.10.0
libtpu: 0.0.40
codegen_flags: <defaults>
</compile_context>

<pallas_src>
import functools

import jax
import jax.numpy as jnp
from jax import lax
from jax.experimental import pallas as pl
from jax.experimental.pallas import tpu as pltpu


# -----------------------------------------------------------------------------
# Pallas kernel: per grid step, G images:
#   fused conv matmul (K padded to 128) -> ReLU -> GAP(sum) -> FC -> L2N
# All operands are lane-dense (last dim = 128).
# -----------------------------------------------------------------------------
def _siamese_encoder_kernel(taps_ref, prm_ref, out_ref, *, hw, kpad, cpad,
                            bc_off, wf_off, bf_off):
    # taps_ref: (G*HW, KPAD)   zero-K-padded im2col taps, 1 row per output pixel
    # prm_ref : (ROWS, 128)    packed parameter slab:
    #             rows [0, kpad)            : conv weight (KPAD, CPAD), scaled by 1/HW
    #             row  bc_off               : conv bias   (1, CPAD),    scaled by 1/HW
    #             rows [wf_off, wf_off+cpad): fc weight   (CPAD, DPAD)
    #             row  bf_off               : fc bias     (1, DPAD)
    # out_ref : (G, DPAD)      L2-normalized features (padded lanes exactly 0)
    g = out_ref.shape[0]

    taps = taps_ref[...]                               # (G*HW, KPAD)
    wc = prm_ref[0:kpad, :]                            # (KPAD, CPAD)
    bc = prm_ref[bc_off:bc_off + 1, :]                 # (1, CPAD)
    wf = prm_ref[wf_off:wf_off + cpad, :]              # (CPAD, DPAD)
    bf = prm_ref[bf_off:bf_off + 1, :]                 # (1, DPAD)

    # Fused convolution: one MXU matmul with K = KPAD = 128.
    acc = jnp.dot(taps, wc, preferred_element_type=jnp.float32)   # (G*HW, CPAD)
    acc = jnp.maximum(acc + bc, 0.0)

    # Global average pool: 1/HW already folded into wc/bc, so a plain sum over
    # the HW axis of the lane-dense (G, HW, CPAD) view (cheap VPU add-reduce).
    pooled = jnp.sum(acc.reshape(g, hw, cpad), axis=1)             # (G, CPAD)

    # Linear projection -> (G, DPAD).  Padded wf columns / bf entries are exact
    # zeros, so feat's padded lanes are exactly 0.
    feat = jnp.dot(pooled, wf, preferred_element_type=jnp.float32) + bf

    # L2N: x / (||x||_2 + eps).  Because padded lanes of feat are exactly 0,
    # the sum of squares over DPAD lanes equals the sum over the true D lanes.
    # Reciprocal goes to the (otherwise idle) EUP slot.
    nrm = jnp.sqrt(jnp.sum(feat * feat, axis=-1, keepdims=True))
    out_ref[...] = (feat * pl.reciprocal(nrm + 1e-6, approx=True)).astype(out_ref.dtype)


# -----------------------------------------------------------------------------
# Wrapper: XLA glue (im2col + K/N padding + param packing) and one pallas_call.
# -----------------------------------------------------------------------------
def _grid_steps_for_device() -> int:
    """1 grid step on single-TC chips (v5e/v6e); 2 parallel steps on v7x."""
    try:
        kind = jax.devices()[0].device_kind.lower()
        if "v7" in kind:
            return 2
    except Exception:  # pragma: no cover - be permissive about device queries
        pass
    return 1


@functools.partial(jax.jit, static_argnames=("n_steps",))
def _siamese_forward_impl(x1, x2, params, *, n_steps):
    wc, bc, wf, bf = params["wc"], params["bc"], params["wf"], params["bf"]
    b, cin, h, w = x1.shape
    cconv = wc.shape[0]          # PyTorch conv weight layout (Cout, Cin, 3, 3)
    d = wf.shape[1]
    hw = h * w
    k9 = 9 * cin

    # Lane-dense padded dims (toy shapes: all <= 128).
    kpad = 128                   # conv matmul K
    cpad = 128                   # conv output channels / fc input
    dpad = ((d + 127) // 128) * 128   # fc output / feature lanes (= 128 here)
    assert k9 <= kpad and cconv <= cpad and dpad == 128, "toy-shape padding only"

    n_total = 2 * b
    if n_total % n_steps != 0:
        n_steps = 1
    g = n_total // n_steps       # images per grid step

    # ---- glue: im2col in XLA, lane-dense, K zero-padded to 128 -------------
    x = jnp.transpose(jnp.concatenate([x1, x2], axis=0), (0, 2, 3, 1))  # (2B,H,W,Cin)
    xp = jnp.pad(x, ((0, 0), (1, 1), (1, 1), (0, 0)))                   # SAME pad
    cols = [xp[:, kh:kh + h, kw:kw + w, :] for kh in range(3) for kw in range(3)]
    taps = jnp.concatenate(cols, axis=-1).reshape(n_total, hw, k9)      # (2B,HW,9Cin)
    taps = jnp.pad(taps, ((0, 0), (0, 0), (0, kpad - k9)))              # K -> 128
    taps = taps.reshape(n_steps, g * hw, kpad)

    # ---- glue: pack all parameters into one (ROWS, 128) slab ---------------
    inv_hw = 1.0 / hw
    # (Cout, Cin, 3, 3) -> (kh, kw, cin, cout) -> (9*Cin, Cconv); fold 1/HW.
    wc_k = jnp.transpose(wc, (2, 3, 1, 0)).reshape(k9, cconv) * inv_hw
    wc_k = jnp.pad(wc_k, ((0, kpad - k9), (0, cpad - cconv)))           # (KPAD,CPAD)
    bc_k = jnp.pad((bc * inv_hw).reshape(1, cconv), ((0, 0), (0, cpad - cconv)))
    wf_k = jnp.pad(wf, ((0, cpad - cconv), (0, dpad - d)))              # (CPAD,DPAD)
    bf_k = jnp.pad(bf.reshape(1, d), ((0, 0), (0, dpad - d)))

    bc_off = kpad                 # sublane-aligned section offsets (multiples of 8)
    wf_off = kpad + 8
    bf_off = kpad + 8 + cpad
    rows = bf_off + 8

    prm = jnp.zeros((rows, 128), jnp.float32)
    prm = prm.at[0:kpad, :].set(wc_k)
    prm = prm.at[bc_off:bc_off + 1, :].set(bc_k)
    prm = prm.at[wf_off:wf_off + cpad, :].set(wf_k)
    prm = prm.at[bf_off:bf_off + 1, :].set(bf_k)

    kernel = functools.partial(
        _siamese_encoder_kernel,
        hw=hw, kpad=kpad, cpad=cpad,
        bc_off=bc_off, wf_off=wf_off, bf_off=bf_off,
    )

    out = pl.pallas_call(
        kernel,
        out_shape=jax.ShapeDtypeStruct((n_steps, g, dpad), jnp.float32),
        grid_spec=pltpu.PrefetchScalarGridSpec(
            num_scalar_prefetch=0,
            grid=(n_steps,),
            in_specs=[
                # Leading size-1 block dim squeezed -> kernel sees (G*HW, KPAD).
                pl.BlockSpec((None, g * hw, kpad), lambda i: (i, 0, 0)),
                # Single packed parameter slab, same block every step.
                pl.BlockSpec((rows, 128), lambda i: (0, 0)),
            ],
            out_specs=pl.BlockSpec((None, g, dpad), lambda i: (i, 0, 0)),
        ),
        compiler_params=pltpu.CompilerParams(
            dimension_semantics=("parallel",),
        ),
    )(taps, prm)

    feats = out.reshape(n_total, dpad)[:, :d]
    return feats[:b], feats[b:]


def siamese_forward(x1, x2, params):
    """SiameseNet.forward(x1, x2) -> (f1, f2), each (B, D) L2-normalized."""
    return _siamese_forward_impl(x1, x2, params, n_steps=_grid_steps_for_device())


# -----------------------------------------------------------------------------
# Pure-JAX reference of the same base model + L2N (for correctness check).
# -----------------------------------------------------------------------------
def _reference_branch(x_nchw, params):
    wc, bc, wf, bf = params["wc"], params["bc"], params["wf"], params["bf"]
    x = jnp.transpose(x_nchw, (0, 2, 3, 1))  # NHWC
    wc_hwio = jnp.transpose(wc, (2, 3, 1, 0))
    y = lax.conv_general_dilated(
        x, wc_hwio, window_strides=(1, 1), padding="SAME",
        dimension_numbers=("NHWC", "HWIO", "NHWC"),
    )
    y = jax.nn.relu(y + bc)
    pooled = jnp.mean(y, axis=(1, 2))
    feat = pooled @ wf + bf
    nrm = jnp.sqrt(jnp.sum(feat * feat, axis=1, keepdims=True))
    return feat / (nrm + 1e-6)


if __name__ == "__main__":
    # small shapes: batch=2, Cin=4, H=W=16, Cconv=8, feature dim D=32
    B, CIN, H, W = 2, 4, 16, 16
    CCONV, D = 8, 32

    key = jax.random.PRNGKey(0)
    k1, k2, k3, k4, k5, k6 = jax.random.split(key, 6)

    x1 = jax.random.normal(k1, (B, CIN, H, W), dtype=jnp.float32)
    x2 = jax.random.normal(k2, (B, CIN, H, W), dtype=jnp.float32)

    params = {
        # PyTorch Conv2d weight layout (Cout, Cin, kh, kw)
        "wc": 0.1 * jax.random.normal(k3, (CCONV, CIN, 3, 3), dtype=jnp.float32),
        "bc": 0.1 * jax.random.normal(k4, (CCONV,), dtype=jnp.float32),
        # Linear weight stored as (in, out)
        "wf": 0.1 * jax.random.normal(k5, (CCONV, D), dtype=jnp.float32),
        "bf": 0.1 * jax.random.normal(k6, (D,), dtype=jnp.float32),
    }

    f1, f2 = siamese_forward(x1, x2, params)
    jax.block_until_ready((f1, f2))

    r1 = _reference_branch(x1, params)
    r2 = _reference_branch(x2, params)

    assert f1.shape == (B, D) and f2.shape == (B, D)
    # Tolerance slightly looser than exact because of the approximate (EUP)
    # reciprocal used in the in-kernel L2 normalization.
    assert jnp.allclose(f1, r1, atol=2e-3, rtol=2e-3)
    assert jnp.allclose(f2, r2, atol=2e-3, rtol=2e-3)
    # L2N check: unit norm (up to eps / approx-reciprocal error)
    assert jnp.allclose(jnp.linalg.norm(f1, axis=1), 1.0, atol=5e-3)
    assert jnp.allclose(jnp.linalg.norm(f2, axis=1), 1.0, atol=5e-3)

    print("KERNEL_OK")
</pallas_src>

<mosaic_0001>
module attributes {stable_mosaic.version = 11 : i64} {
  func.func @_siamese_encoder_kernel(%arg0: i32, %arg1: memref<1x1024x128xf32, #tpu.memory_space<vmem>>, %arg2: memref<272x128xf32, #tpu.memory_space<vmem>>, %arg3: memref<1x4x128xf32, #tpu.memory_space<vmem>>) attributes {dimension_semantics = [#tpu.dimension_semantics<parallel>], iteration_bounds = array<i64: 1>, scalar_prefetch = 0 : i64, scratch_operands = 0 : i64, tpu.core_type = #tpu.core_type<tc>, window_params = [{transform_indices = @transform_0, window_bounds = array<i64: 1, 1024, 128>}, {pipeline_mode = #tpu.pipeline_mode<synchronous>, transform_indices = @transform_1, window_bounds = array<i64: 272, 128>}, {transform_indices = @transform_2, window_bounds = array<i64: 1, 4, 128>}]} {
    %c0 = arith.constant 0 : index
    %c0_0 = arith.constant 0 : index
    %c0_1 = arith.constant 0 : index
    %0 = vector.load %arg1[%c0, %c0_0, %c0_1] : memref<1x1024x128xf32, #tpu.memory_space<vmem>>, vector<1x1024x128xf32>
    %1 = vector.shape_cast %0 : vector<1x1024x128xf32> to vector<1024x128xf32>
    %c0_2 = arith.constant 0 : index
    %c0_3 = arith.constant 0 : index
    %2 = vector.load %arg2[%c0_2, %c0_3] : memref<272x128xf32, #tpu.memory_space<vmem>>, vector<128x128xf32>
    %c128 = arith.constant 128 : index
    %c0_4 = arith.constant 0 : index
    %3 = vector.load %arg2[%c128, %c0_4] : memref<272x128xf32, #tpu.memory_space<vmem>>, vector<1x128xf32>
    %c136 = arith.constant 136 : index
    %c0_5 = arith.constant 0 : index
    %4 = vector.load %arg2[%c136, %c0_5] : memref<272x128xf32, #tpu.memory_space<vmem>>, vector<128x128xf32>
    %c264 = arith.constant 264 : index
    %c0_6 = arith.constant 0 : index
    %5 = vector.load %arg2[%c264, %c0_6] : memref<272x128xf32, #tpu.memory_space<vmem>>, vector<1x128xf32>
    %cst = arith.constant dense<0.000000e+00> : vector<1024x128xf32>
    %6 = tpu.matmul %1, %2, %cst {dimension_numbers = #tpu.dot_dimension_numbers<[1], [0], [0], [1], [0, 0, 1, 1], [], []>} : vector<1024x128xf32>, vector<128x128xf32>, vector<1024x128xf32> -> vector<1024x128xf32>
    %7 = vector.broadcast %3 : vector<1x128xf32> to vector<1024x128xf32>
    %8 = arith.addf %6, %7 : vector<1024x128xf32>
    %cst_7 = arith.constant 0.000000e+00 : f32
    %9 = vector.broadcast %cst_7 : f32 to vector<1024x128xf32>
    %10 = arith.maximumf %8, %9 : vector<1024x128xf32>
    %11 = vector.shape_cast %10 : vector<1024x128xf32> to vector<4x256x128xf32>
    %cst_8 = arith.constant dense<0.000000e+00> : vector<4x128xf32>
    %12 = vector.multi_reduction <add>, %11, %cst_8 [1] : vector<4x256x128xf32> to vector<4x128xf32>
    %cst_9 = arith.constant dense<0.000000e+00> : vector<4x128xf32>
    %13 = tpu.matmul %12, %4, %cst_9 {dimension_numbers = #tpu.dot_dimension_numbers<[1], [0], [0], [1], [0, 0, 1, 1], [], []>} : vector<4x128xf32>, vector<128x128xf32>, vector<4x128xf32> -> vector<4x128xf32>
    %14 = vector.broadcast %5 : vector<1x128xf32> to vector<4x128xf32>
    %15 = arith.addf %13, %14 : vector<4x128xf32>
    %16 = arith.mulf %15, %15 : vector<4x128xf32>
    %cst_10 = arith.constant dense<0.000000e+00> : vector<4xf32>
    %17 = vector.multi_reduction <add>, %16, %cst_10 [1] : vector<4x128xf32> to vector<4xf32>
    %18 = vector.shape_cast %17 : vector<4xf32> to vector<4x1xf32>
    %19 = math.sqrt %18 : vector<4x1xf32>
    %cst_11 = arith.constant 9.99999997E-7 : f32
    %20 = vector.broadcast %cst_11 : f32 to vector<4x1xf32>
    %21 = arith.addf %19, %20 : vector<4x1xf32>
    %22 = tpu.reciprocal %21 {approx = true} : vector<4x1xf32> -> vector<4x1xf32>
    %23 = vector.broadcast %22 : vector<4x1xf32> to vector<4x128xf32>
    %24 = arith.mulf %15, %23 : vector<4x128xf32>
    %c0_12 = arith.constant 0 : index
    %c0_13 = arith.constant 0 : index
    %c0_14 = arith.constant 0 : index
    %25 = vector.load %arg3[%c0_12, %c0_13, %c0_14] : memref<1x4x128xf32, #tpu.memory_space<vmem>>, vector<1x4x128xf32>
    %26 = vector.shape_cast %25 : vector<1x4x128xf32> to vector<4x128xf32>
    %27 = vector.shape_cast %24 : vector<4x128xf32> to vector<1x4x128xf32>
    tpu.vector_store %arg3[%c0_12, %c0_13, %c0_14], %27 {strides = array<i32>} : memref<1x4x128xf32, #tpu.memory_space<vmem>>, vector<1x4x128xf32>,
    return
  }
  func.func @transform_0(%arg0: i32) -> (i32, i32, i32) {
    %c0_i32 = arith.constant 0 : i32
    %c0_i32_0 = arith.constant 0 : i32
    %c0_i32_1 = arith.constant 0 : i32
    return %arg0, %c0_i32, %c0_i32_0 : i32, i32, i32
  }
  func.func @transform_1(%arg0: i32) -> (i32, i32) {
    %c0_i32 = arith.constant 0 : i32
    %c0_i32_0 = arith.constant 0 : i32
    %c0_i32_1 = arith.constant 0 : i32
    return %c0_i32, %c0_i32_0 : i32, i32
  }
  func.func @transform_2(%arg0: i32) -> (i32, i32, i32) {
    %c0_i32 = arith.constant 0 : i32
    %c0_i32_0 = arith.constant 0 : i32
    %c0_i32_1 = arith.constant 0 : i32
    return %arg0, %c0_i32, %c0_i32_0 : i32, i32, i32
  }
}

</mosaic_0001>

<llo_original>
// kernel: _siamese_forward_impl.1
$region0: #{_siamese_forward_impl.1}
  #allocation0 [shape = 'u32[]', space=smem, size = 0x4, offset = 0x4, fixed_abs, tag = 'smem constant byte address 0x4 - core index']
  #allocation1 [shape = 'u32[144,128]{1,0:T(1,128)}', space=vmem, size = 0x12000, scoped, tag = 'internal scratch']
  %s0 = inlined_call_operand.vmem [shape: f32[1,1024,128], index: 0, kind: input, shape index: {}]
  %s1 = inlined_call_operand.vmem [shape: f32[272,128], index: 1, kind: input, shape index: {}]
  %s2 = inlined_call_operand.vmem [shape: f32[1,4,128], index: 2, kind: output, shape index: {}]
  %s3 = sld [smem:[#allocation0]]
  $region18: #{_siamese_forward_impl.1} parent=0
    _
  %s5 = ssub.s32 1, %s3
  %s6 = scalar_select 0, %s5, %s3
  // Predicated region
  $region2: #{_siamese_forward_impl.1} parent=0 // pred_check
    _
  $region3: #{_siamese_forward_impl.1} parent=0 // pred_check_branch
    %8 = sbr.rel (0) target = $region5
  $region4: #{_siamese_forward_impl.1} parent=0 // pred_region
    _
  $region5: #{_siamese_forward_impl.1} parent=0 // pred_fallthru
    _
  // Predicated region
  $region6: #{_siamese_forward_impl.1} parent=0 // pred_check
    _
  $region7: #{_siamese_forward_impl.1} parent=0 // pred_check_branch
    %10 = sbr.rel (0) target = $region9
  $region8: #{_siamese_forward_impl.1} parent=0 // pred_region
    _
  $region9: #{_siamese_forward_impl.1} parent=0 // pred_fallthru
    _
  %v11 = vld [vmem:[%s0] sm:$0xff]
  %v12 = vld [vmem:[%s0 + $0x8] sm:$0xff]
  %v13 = vld [vmem:[%s0 + $0x10] sm:$0xff]
  %v14 = vld [vmem:[%s0 + $0x18] sm:$0xff]
  %v15 = vld [vmem:[%s0 + $0x20] sm:$0xff]
  %v16 = vld [vmem:[%s0 + $0x28] sm:$0xff]
  %v17 = vld [vmem:[%s0 + $0x30] sm:$0xff]
  %v18 = vld [vmem:[%s0 + $0x38] sm:$0xff]
  %v19 = vld [vmem:[%s0 + $0x40] sm:$0xff]
  %v20 = vld [vmem:[%s0 + $0x48] sm:$0xff]
  %v21 = vld [vmem:[%s0 + $0x50] sm:$0xff]
  %v22 = vld [vmem:[%s0 + $0x58] sm:$0xff]
  %v23 = vld [vmem:[%s0 + $0x60] sm:$0xff]
  %v24 = vld [vmem:[%s0 + $0x68] sm:$0xff]
  %v25 = vld [vmem:[%s0 + $0x70] sm:$0xff]
  %v26 = vld [vmem:[%s0 + $0x78] sm:$0xff]
  %v27 = vld [vmem:[%s0 + $0x80] sm:$0xff]
  %v28 = vld [vmem:[%s0 + $0x88] sm:$0xff]
  %v29 = vld [vmem:[%s0 + $0x90] sm:$0xff]
  %v30 = vld [vmem:[%s0 + $0x98] sm:$0xff]
  %v31 = vld [vmem:[%s0 + $0xa0] sm:$0xff]
  %v32 = vld [vmem:[%s0 + $0xa8] sm:$0xff]
  %v33 = vld [vmem:[%s0 + $0xb0] sm:$0xff]
  %v34 = vld [vmem:[%s0 + $0xb8] sm:$0xff]
  %v35 = vld [vmem:[%s0 + $0xc0] sm:$0xff]
  %v36 = vld [vmem:[%s0 + $0xc8] sm:$0xff]
  %v37 = vld [vmem:[%s0 + $0xd0] sm:$0xff]
  %v38 = vld [vmem:[%s0 + $0xd8] sm:$0xff]
  %v39 = vld [vmem:[%s0 + $0xe0] sm:$0xff]
  %v40 = vld [vmem:[%s0 + $0xe8] sm:$0xff]
  %v41 = vld [vmem:[%s0 + $0xf0] sm:$0xff]
  %v42 = vld [vmem:[%s0 + $0xf8] sm:$0xff]
  %v43 = vld [vmem:[%s0 + $0x100] sm:$0xff]
  %v44 = vld [vmem:[%s0 + $0x108] sm:$0xff]
  %v45 = vld [vmem:[%s0 + $0x110] sm:$0xff]
  %v46 = vld [vmem:[%s0 + $0x118] sm:$0xff]
  %v47 = vld [vmem:[%s0 + $0x120] sm:$0xff]
  %v48 = vld [vmem:[%s0 + $0x128] sm:$0xff]
  %v49 = vld [vmem:[%s0 + $0x130] sm:$0xff]
  %v50 = vld [vmem:[%s0 + $0x138] sm:$0xff]
  %v51 = vld [vmem:[%s0 + $0x140] sm:$0xff]
  %v52 = vld [vmem:[%s0 + $0x148] sm:$0xff]
  %v53 = vld [vmem:[%s0 + $0x150] sm:$0xff]
  %v54 = vld [vmem:[%s0 + $0x158] sm:$0xff]
  %v55 = vld [vmem:[%s0 + $0x160] sm:$0xff]
  %v56 = vld [vmem:[%s0 + $0x168] sm:$0xff]
  %v57 = vld [vmem:[%s0 + $0x170] sm:$0xff]
  %v58 = vld [vmem:[%s0 + $0x178] sm:$0xff]
  %v59 = vld [vmem:[%s0 + $0x180] sm:$0xff]
  %v60 = vld [vmem:[%s0 + $0x188] sm:$0xff]
  %v61 = vld [vmem:[%s0 + $0x190] sm:$0xff]
  %v62 = vld [vmem:[%s0 + $0x198] sm:$0xff]
  %v63 = vld [vmem:[%s0 + $0x1a0] sm:$0xff]
  %v64 = vld [vmem:[%s0 + $0x1a8] sm:$0xff]
  %v65 = vld [vmem:[%s0 + $0x1b0] sm:$0xff]
  %v66 = vld [vmem:[%s0 + $0x1b8] sm:$0xff]
  %v67 = vld [vmem:[%s0 + $0x1c0] sm:$0xff]
  %v68 = vld [vmem:[%s0 + $0x1c8] sm:$0xff]
  %v69 = vld [vmem:[%s0 + $0x1d0] sm:$0xff]
  %v70 = vld [vmem:[%s0 + $0x1d8] sm:$0xff]
  %v71 = vld [vmem:[%s0 + $0x1e0] sm:$0xff]
  %v72 = vld [vmem:[%s0 + $0x1e8] sm:$0xff]
  %v73 = vld [vmem:[%s0 + $0x1f0] sm:$0xff]
  %v74 = vld [vmem:[%s0 + $0x1f8] sm:$0xff]
  %v75 = vld [vmem:[%s0 + $0x200] sm:$0xff]
  %v76 = vld [vmem:[%s0 + $0x208] sm:$0xff]
  %v77 = vld [vmem:[%s0 + $0x210] sm:$0xff]
  %v78 = vld [vmem:[%s0 + $0x218] sm:$0xff]
  %v79 = vld [vmem:[%s0 + $0x220] sm:$0xff]
  %v80 = vld [vmem:[%s0 + $0x228] sm:$0xff]
  %v81 = vld [vmem:[%s0 + $0x230] sm:$0xff]
  %v82 = vld [vmem:[%s0 + $0x238] sm:$0xff]
  %v83 = vld [vmem:[%s0 + $0x240] sm:$0xff]
  %v84 = vld [vmem:[%s0 + $0x248] sm:$0xff]
  %v85 = vld [vmem:[%s0 + $0x250] sm:$0xff]
  %v86 = vld [vmem:[%s0 + $0x258] sm:$0xff]
  %v87 = vld [vmem:[%s0 + $0x260] sm:$0xff]
  %v88 = vld [vmem:[%s0 + $0x268] sm:$0xff]
  %v89 = vld [vmem:[%s0 + $0x270] sm:$0xff]
  %v90 = vld [vmem:[%s0 + $0x278] sm:$0xff]
  %v91 = vld [vmem:[%s0 + $0x280] sm:$0xff]
  %v92 = vld [vmem:[%s0 + $0x288] sm:$0xff]
  %v93 = vld [vmem:[%s0 + $0x290] sm:$0xff]
  %v94 = vld [vmem:[%s0 + $0x298] sm:$0xff]
  %v95 = vld [vmem:[%s0 + $0x2a0] sm:$0xff]
  %v96 = vld [vmem:[%s0 + $0x2a8] sm:$0xff]
  %v97 = vld [vmem:[%s0 + $0x2b0] sm:$0xff]
  %v98 = vld [vmem:[%s0 + $0x2b8] sm:$0xff]
  %v99 = vld [vmem:[%s0 + $0x2c0] sm:$0xff]
  %v100 = vld [vmem:[%s0 + $0x2c8] sm:$0xff]
  %v101 = vld [vmem:[%s0 + $0x2d0] sm:$0xff]
  %v102 = vld [vmem:[%s0 + $0x2d8] sm:$0xff]
  %v103 = vld [vmem:[%s0 + $0x2e0] sm:$0xff]
  %v104 = vld [vmem:[%s0 + $0x2e8] sm:$0xff]
  %v105 = vld [vmem:[%s0 + $0x2f0] sm:$0xff]
  %v106 = vld [vmem:[%s0 + $0x2f8] sm:$0xff]
  %v107 = vld [vmem:[%s0 + $0x300] sm:$0xff]
  %v108 = vld [vmem:[%s0 + $0x308] sm:$0xff]
  %v109 = vld [vmem:[%s0 + $0x310] sm:$0xff]
  %v110 = vld [vmem:[%s0 + $0x318] sm:$0xff]
  %v111 = vld [vmem:[%s0 + $0x320] sm:$0xff]
  %v112 = vld [vmem:[%s0 + $0x328] sm:$0xff]
  %v113 = vld [vmem:[%s0 + $0x330] sm:$0xff]
  %v114 = vld [vmem:[%s0 + $0x338] sm:$0xff]
  %v115 = vld [vmem:[%s0 + $0x340] sm:$0xff]
  %v116 = vld [vmem:[%s0 + $0x348] sm:$0xff]
  %v117 = vld [vmem:[%s0 + $0x350] sm:$0xff]
  %v118 = vld [vmem:[%s0 + $0x358] sm:$0xff]
  %v119 = vld [vmem:[%s0 + $0x360] sm:$0xff]
  %v120 = vld [vmem:[%s0 + $0x368] sm:$0xff]
  %v121 = vld [vmem:[%s0 + $0x370] sm:$0xff]
  %v122 = vld [vmem:[%s0 + $0x378] sm:$0xff]
  %v123 = vld [vmem:[%s0 + $0x380] sm:$0xff]
  %v124 = vld [vmem:[%s0 + $0x388] sm:$0xff]
  %v125 = vld [vmem:[%s0 + $0x390] sm:$0xff]
  %v126 = vld [vmem:[%s0 + $0x398] sm:$0xff]
  %v127 = vld [vmem:[%s0 + $0x3a0] sm:$0xff]
  %v128 = vld [vmem:[%s0 + $0x3a8] sm:$0xff]
  %v129 = vld [vmem:[%s0 + $0x3b0] sm:$0xff]
  %v130 = vld [vmem:[%s0 + $0x3b8] sm:$0xff]
  %v131 = vld [vmem:[%s0 + $0x3c0] sm:$0xff]
  %v132 = vld [vmem:[%s0 + $0x3c8] sm:$0xff]
  %v133 = vld [vmem:[%s0 + $0x3d0] sm:$0xff]
  %v134 = vld [vmem:[%s0 + $0x3d8] sm:$0xff]
  %v135 = vld [vmem:[%s0 + $0x3e0] sm:$0xff]
  %v136 = vld [vmem:[%s0 + $0x3e8] sm:$0xff]
  %v137 = vld [vmem:[%s0 + $0x3f0] sm:$0xff]
  %v138 = vld [vmem:[%s0 + $0x3f8] sm:$0xff]
  %v139 = vld [vmem:[%s1] sm:$0xff]
  %v140 = vld [vmem:[%s1 + $0x8] sm:$0xff]
  %v141 = vld [vmem:[%s1 + $0x10] sm:$0xff]
  %v142 = vld [vmem:[%s1 + $0x18] sm:$0xff]
  %v143 = vld [vmem:[%s1 + $0x20] sm:$0xff]
  %v144 = vld [vmem:[%s1 + $0x28] sm:$0xff]
  %v145 = vld [vmem:[%s1 + $0x30] sm:$0xff]
  %v146 = vld [vmem:[%s1 + $0x38] sm:$0xff]
  %v147 = vld [vmem:[%s1 + $0x40] sm:$0xff]
  %v148 = vld [vmem:[%s1 + $0x48] sm:$0xff]
  %v149 = vld [vmem:[%s1 + $0x50] sm:$0xff]
  %v150 = vld [vmem:[%s1 + $0x58] sm:$0xff]
  %v151 = vld [vmem:[%s1 + $0x60] sm:$0xff]
  %v152 = vld [vmem:[%s1 + $0x68] sm:$0xff]
  %v153 = vld [vmem:[%s1 + $0x70] sm:$0xff]
  %v154 = vld [vmem:[%s1 + $0x78] sm:$0xff]
  %v155 = vld [vmem:[%s1 + $0x80] sm:$0x1]
  %v156 = vld [vmem:[%s1 + $0x88] sm:$0xff]
  %v157 = vld [vmem:[%s1 + $0x90] sm:$0xff]
  %v158 = vld [vmem:[%s1 + $0x98] sm:$0xff]
  %v159 = vld [vmem:[%s1 + $0xa0] sm:$0xff]
  %v160 = vld [vmem:[%s1 + $0xa8] sm:$0xff]
  %v161 = vld [vmem:[%s1 + $0xb0] sm:$0xff]
  %v162 = vld [vmem:[%s1 + $0xb8] sm:$0xff]
  %v163 = vld [vmem:[%s1 + $0xc0] sm:$0xff]
  %v164 = vld [vmem:[%s1 + $0xc8] sm:$0xff]
  %v165 = vld [vmem:[%s1 + $0xd0] sm:$0xff]
  %v166 = vld [vmem:[%s1 + $0xd8] sm:$0xff]
  %v167 = vld [vmem:[%s1 + $0xe0] sm:$0xff]
  %v168 = vld [vmem:[%s1 + $0xe8] sm:$0xff]
  %v169 = vld [vmem:[%s1 + $0xf0] sm:$0xff]
  %v170 = vld [vmem:[%s1 + $0xf8] sm:$0xff]
  %v171 = vld [vmem:[%s1 + $0x100] sm:$0xff]
  %v172 = vld [vmem:[%s1 + $0x108] sm:$0x1]
  %v173 = vlaneseq
  %v174 = vshrl.u32 %v173, 7
  %v175 = vsub.s32 0, %v174
  %v176 = vrot.slane %v155, %v175
  %177 = vmatprep.subr.mxu0 0.0
  %178 = vmatpush1.msra.mxu0 %v139
  %179 = vmatprep.subr.mxu0 0.0
  %180 = vmatpush1.msra.mxu0 %v140
  %181 = vmatprep.subr.mxu0 0.0
  %182 = vmatpush1.msra.mxu0 %v141
  %183 = vmatprep.subr.mxu0 0.0
  %184 = vmatpush1.msra.mxu0 %v142
  %185 = vmatprep.subr.mxu0 0.0
  %186 = vmatpush1.msra.mxu0 %v143
  %187 = vmatprep.subr.mxu0 0.0
  %188 = vmatpush1.msra.mxu0 %v144
  %189 = vmatprep.subr.mxu0 0.0
  %190 = vmatpush1.msra.mxu0 %v145
  %191 = vmatprep.subr.mxu0 0.0
  %192 = vmatpush1.msra.mxu0 %v146
  %193 = vmatprep.subr.mxu0 0.0
  %194 = vmatpush1.msra.mxu0 %v147
  %195 = vmatprep.subr.mxu0 0.0
  %196 = vmatpush1.msra.mxu0 %v148
  %197 = vmatprep.subr.mxu0 0.0
  %198 = vmatpush1.msra.mxu0 %v149
  %199 = vmatprep.subr.mxu0 0.0
  %200 = vmatpush1.msra.mxu0 %v150
  %201 = vmatprep.subr.mxu0 0.0
  %202 = vmatpush1.msra.mxu0 %v151
  %203 = vmatprep.subr.mxu0 0.0
  %204 = vmatpush1.msra.mxu0 %v152
  %205 = vmatprep.subr.mxu0 0.0
  %206 = vmatpush1.msra.mxu0 %v153
  %207 = vmatprep.subr.mxu0 0.0
  %208 = vmatpush1.msra.mxu0 %v154
  %209 = vmatprep.subr.mxu0 0.0
  %210 = vmatpush1.msra.mxu0 0.0
  %211 = vmatprep.subr.mxu0 0.0
  %212 = vmatpush1.msra.mxu0 0.0
  %213 = vmatprep.subr.mxu0 0.0
  %214 = vmatpush1.msra.mxu0 0.0
  %215 = vmatprep.subr.mxu0 0.0
  %216 = vmatpush1.msra.mxu0 0.0
  %217 = vmatprep.subr.mxu0 0.0
  %218 = vmatpush1.msra.mxu0 0.0
  %219 = vmatprep.subr.mxu0 0.0
  %220 = vmatpush1.msra.mxu0 0.0
  %221 = vmatprep.subr.mxu0 0.0
  %222 = vmatpush1.msra.mxu0 0.0
  %223 = vmatprep.subr.mxu0 0.0
  %224 = vmatpush1.msra.mxu0 0.0
  %225 = vmatprep.subr.mxu0 0.0
  %226 = vmatpush1.msra.mxu0 0.0
  %227 = vmatprep.subr.mxu0 0.0
  %228 = vmatpush1.msra.mxu0 0.0
  %229 = vmatprep.subr.mxu0 0.0
  %230 = vmatpush1.msra.mxu0 0.0
  %231 = vmatprep.subr.mxu0 0.0
  %232 = vmatpush1.msra.mxu0 0.0
  %233 = vmatprep.subr.mxu0 0.0
  %234 = vmatpush1.msra.mxu0 0.0
  %235 = vmatprep.subr.mxu0 0.0
  %236 = vmatpush1.msra.mxu0 0.0
  %237 = vmatprep.subr.mxu0 0.0
  %238 = vmatpush1.msra.mxu0 0.0
  %239 = vmatprep.subr.mxu0 0.0
  %240 = vmatpush1.msra.mxu0 0.0
  %241 = vmatprep.mubr.f32.mxu0 0.0
  %242 = vmatmul.mubr.f32.gmra.mrb[0].mxu0 %v11
  %v243 = vpop.f32.mrb[0].mxu0
  %v244 = vadd.f32 %v176, %v243
  %v245 = vpop.f32.mrb[0].mxu0
  %246 = vmatprep.mubr.f32.mxu0 0.0
  %247 = vmatmul.mubr.f32.gmra.mrb[0].mxu0 %v12
  %v248 = vpop.f32.mrb[0].mxu0
  %v249 = vadd.f32 %v176, %v248
  %v250 = vpop.f32.mrb[0].mxu0
  %251 = vmatprep.mubr.f32.mxu0 0.0
  %252 = vmatmul.mubr.f32.gmra.mrb[0].mxu0 %v13
  %v253 = vpop.f32.mrb[0].mxu0
  %v254 = vadd.f32 %v176, %v253
  %v255 = vpop.f32.mrb[0].mxu0
  %256 = vmatprep.mubr.f32.mxu0 0.0
  %257 = vmatmul.mubr.f32.gmra.mrb[0].mxu0 %v14
  %v258 = vpop.f32.mrb[0].mxu0
  %v259 = vadd.f32 %v176, %v258
  %v260 = vpop.f32.mrb[0].mxu0
  %261 = vmatprep.mubr.f32.mxu0 0.0
  %262 = vmatmul.mubr.f32.gmra.mrb[0].mxu0 %v15
  %v263 = vpop.f32.mrb[0].mxu0
  %v264 = vadd.f32 %v176, %v263
  %v265 = vpop.f32.mrb[0].mxu0
  %266 = vmatprep.mubr.f32.mxu0 0.0
  %267 = vmatmul.mubr.f32.gmra.mrb[0].mxu0 %v16
  %v268 = vpop.f32.mrb[0].mxu0
  %v269 = vadd.f32 %v176, %v268
  %v270 = vpop.f32.mrb[0].mxu0
  %271 = vmatprep.mubr.f32.mxu0 0.0
  %272 = vmatmul.mubr.f32.gmra.mrb[0].mxu0 %v17
  %v273 = vpop.f32.mrb[0].mxu0
  %v274 = vadd.f32 %v176, %v273
  %v275 = vpop.f32.mrb[0].mxu0
  %276 = vmatprep.mubr.f32.mxu0 0.0
  %277 = vmatmul.mubr.f32.gmra.mrb[0].mxu0 %v18
  %v278 = vpop.f32.mrb[0].mxu0
  %v279 = vadd.f32 %v176, %v278
  %v280 = vpop.f32.mrb[0].mxu0
  %281 = vmatprep.mubr.f32.mxu0 0.0
  %282 = vmatmul.mubr.f32.gmra.mrb[0].mxu0 %v19
  %v283 = vpop.f32.mrb[0].mxu0
  %v284 = vadd.f32 %v176, %v283
  %v285 = vpop.f32.mrb[0].mxu0
  %286 = vmatprep.mubr.f32.mxu0 0.0
  %287 = vmatmul.mubr.f32.gmra.mrb[0].mxu0 %v20
  %v288 = vpop.f32.mrb[0].mxu0
  %v289 = vadd.f32 %v176, %v288
  %v290 = vpop.f32.mrb[0].mxu0
  %291 = vmatprep.mubr.f32.mxu0 0.0
  %292 = vmatmul.mubr.f32.gmra.mrb[0].mxu0 %v21
  %v293 = vpop.f32.mrb[0].mxu0
  %v294 = vadd.f32 %v176, %v293
  %v295 = vpop.f32.mrb[0].mxu0
  %296 = vmatprep.mubr.f32.mxu0 0.0
  %297 = vmatmul.mubr.f32.gmra.mrb[0].mxu0 %v22
  %v298 = vpop.f32.mrb[0].mxu0
  %v299 = vadd.f32 %v176, %v298
  %v300 = vpop.f32.mrb[0].mxu0
  %301 = vmatprep.mubr.f32.mxu0 0.0
  %302 = vmatmul.mubr.f32.gmra.mrb[0].mxu0 %v23
  %v303 = vpop.f32.mrb[0].mxu0
  %v304 = vadd.f32 %v176, %v303
  %v305 = vpop.f32.mrb[0].mxu0
  %306 = vmatprep.mubr.f32.mxu0 0.0
  %307 = vmatmul.mubr.f32.gmra.mrb[0].mxu0 %v24
  %v308 = vpop.f32.mrb[0].mxu0
  %v309 = vadd.f32 %v176, %v308
  %v310 = vpop.f32.mrb[0].mxu0
  %311 = vmatprep.mubr.f32.mxu0 0.0
  %312 = vmatmul.mubr.f32.gmra.mrb[0].mxu0 %v25
  %v313 = vpop.f32.mrb[0].mxu0
  %v314 = vadd.f32 %v176, %v313
  %v315 = vpop.f32.mrb[0].mxu0
  %316 = vmatprep.mubr.f32.mxu0 0.0
  %317 = vmatmul.mubr.f32.gmra.mrb[0].mxu0 %v26
  %v318 = vpop.f32.mrb[0].mxu0
  %v319 = vadd.f32 %v176, %v318
  %v320 = vpop.f32.mrb[0].mxu0
  %321 = vmatprep.mubr.f32.mxu0 0.0
  %322 = vmatmul.mubr.f32.gmra.mrb[0].mxu0 %v27
  %v323 = vpop.f32.mrb[0].mxu0
  %v324 = vadd.f32 %v176, %v323
  %v325 = vpop.f32.mrb[0].mxu0
  %326 = vmatprep.mubr.f32.mxu0 0.0
  %327 = vmatmul.mubr.f32.gmra.mrb[0].mxu0 %v28
  %v328 = vpop.f32.mrb[0].mxu0
  %v329 = vadd.f32 %v176, %v328
  %v330 = vpop.f32.mrb[0].mxu0
  %331 = vmatprep.mubr.f32.mxu0 0.0
  %332 = vmatmul.mubr.f32.gmra.mrb[0].mxu0 %v29
  %v333 = vpop.f32.mrb[0].mxu0
  %v334 = vadd.f32 %v176, %v333
  %v335 = vpop.f32.mrb[0].mxu0
  %336 = vmatprep.mubr.f32.mxu0 0.0
  %337 = vmatmul.mubr.f32.gmra.mrb[0].mxu0 %v30
  %v338 = vpop.f32.mrb[0].mxu0
  %v339 = vadd.f32 %v176, %v338
  %v340 = vpop.f32.mrb[0].mxu0
  %341 = vmatprep.mubr.f32.mxu0 0.0
  %342 = vmatmul.mubr.f32.gmra.mrb[0].mxu0 %v31
  %v343 = vpop.f32.mrb[0].mxu0
  %v344 = vadd.f32 %v176, %v343
  %v345 = vpop.f32.mrb[0].mxu0
  %346 = vmatprep.mubr.f32.mxu0 0.0
  %347 = vmatmul.mubr.f32.gmra.mrb[0].mxu0 %v32
  %v348 = vpop.f32.mrb[0].mxu0
  %v349 = vadd.f32 %v176, %v348
  %v350 = vpop.f32.mrb[0].mxu0
  %351 = vmatprep.mubr.f32.mxu0 0.0
  %352 = vmatmul.mubr.f32.gmra.mrb[0].mxu0 %v33
  %v353 = vpop.f32.mrb[0].mxu0
  %v354 = vadd.f32 %v176, %v353
  %v355 = vpop.f32.mrb[0].mxu0
  %356 = vmatprep.mubr.f32.mxu0 0.0
  %357 = vmatmul.mubr.f32.gmra.mrb[0].mxu0 %v34
  %v358 = vpop.f32.mrb[0].mxu0
  %v359 = vadd.f32 %v176, %v358
  %v360 = vpop.f32.mrb[0].mxu0
  %361 = vmatprep.mubr.f32.mxu0 0.0
  %362 = vmatmul.mubr.f32.gmra.mrb[0].mxu0 %v35
  %v363 = vpop.f32.mrb[0].mxu0
  %v364 = vadd.f32 %v176, %v363
  %v365 = vpop.f32.mrb[0].mxu0
  %366 = vmatprep.mubr.f32.mxu0 0.0
  %367 = vmatmul.mubr.f32.gmra.mrb[0].mxu0 %v36
  %v368 = vpop.f32.mrb[0].mxu0
  %v369 = vadd.f32 %v176, %v368
  %v370 = vpop.f32.mrb[0].mxu0
  %371 = vmatprep.mubr.f32.mxu0 0.0
  %372 = vmatmul.mubr.f32.gmra.mrb[0].mxu0 %v37
  %v373 = vpop.f32.mrb[0].mxu0
  %v374 = vadd.f32 %v176, %v373
  %v375 = vpop.f32.mrb[0].mxu0
  %376 = vmatprep.mubr.f32.mxu0 0.0
  %377 = vmatmul.mubr.f32.gmra.mrb[0].mxu0 %v38
  %v378 = vpop.f32.mrb[0].mxu0
  %v379 = vadd.f32 %v176, %v378
  %v380 = vpop.f32.mrb[0].mxu0
  %381 = vmatprep.mubr.f32.mxu0 0.0
  %382 = vmatmul.mubr.f32.gmra.mrb[0].mxu0 %v39
  %v383 = vpop.f32.mrb[0].mxu0
  %v384 = vadd.f32 %v176, %v383
  %v385 = vpop.f32.mrb[0].mxu0
  %386 = vmatprep.mubr.f32.mxu0 0.0
  %387 = vmatmul.mubr.f32.gmra.mrb[0].mxu0 %v40
  %v388 = vpop.f32.mrb[0].mxu0
  %v389 = vadd.f32 %v176, %v388
  %v390 = vpop.f32.mrb[0].mxu0
  %391 = vmatprep.mubr.f32.mxu0 0.0
  %392 = vmatmul.mubr.f32.gmra.mrb[0].mxu0 %v41
  %v393 = vpop.f32.mrb[0].mxu0
  %v394 = vadd.f32 %v176, %v393
  %v395 = vpop.f32.mrb[0].mxu0
  %396 = vmatprep.mubr.f32.mxu0 0.0
  %397 = vmatmul.mubr.f32.gmra.mrb[0].mxu0 %v42
  %v398 = vpop.f32.mrb[0].mxu0
  %v399 = vadd.f32 %v176, %v398
  %v400 = vpop.f32.mrb[0].mxu0
  %401 = vmatprep.mubr.f32.mxu0 0.0
  %402 = vmatmul.mubr.f32.gmra.mrb[0].mxu0 %v43
  %v403 = vpop.f32.mrb[0].mxu0
  %v404 = vadd.f32 %v176, %v403
  %v405 = vpop.f32.mrb[0].mxu0
  %406 = vmatprep.mubr.f32.mxu0 0.0
  %407 = vmatmul.mubr.f32.gmra.mrb[0].mxu0 %v44
  %v408 = vpop.f32.mrb[0].mxu0
  %v409 = vadd.f32 %v176, %v408
  %v410 = vpop.f32.mrb[0].mxu0
  %411 = vmatprep.mubr.f32.mxu0 0.0
  %412 = vmatmul.mubr.f32.gmra.mrb[0].mxu0 %v45
  %v413 = vpop.f32.mrb[0].mxu0
  %v414 = vadd.f32 %v176, %v413
  %v415 = vpop.f32.mrb[0].mxu0
  %416 = vmatprep.mubr.f32.mxu0 0.0
  %417 = vmatmul.mubr.f32.gmra.mrb[0].mxu0 %v46
  %v418 = vpop.f32.mrb[0].mxu0
  %v419 = vadd.f32 %v176, %v418
  %v420 = vpop.f32.mrb[0].mxu0
  %421 = vmatprep.mubr.f32.mxu0 0.0
  %422 = vmatmul.mubr.f32.gmra.mrb[0].mxu0 %v47
  %v423 = vpop.f32.mrb[0].mxu0
  %v424 = vadd.f32 %v176, %v423
  %v425 = vpop.f32.mrb[0].mxu0
  %426 = vmatprep.mubr.f32.mxu0 0.0
  %427 = vmatmul.mubr.f32.gmra.mrb[0].mxu0 %v48
  %v428 = vpop.f32.mrb[0].mxu0
  %v429 = vadd.f32 %v176, %v428
  %v430 = vpop.f32.mrb[0].mxu0
  %431 = vmatprep.mubr.f32.mxu0 0.0
  %432 = vmatmul.mubr.f32.gmra.mrb[0].mxu0 %v49
  %v433 = vpop.f32.mrb[0].mxu0
  %v434 = vadd.f32 %v176, %v433
  %v435 = vpop.f32.mrb[0].mxu0
  %436 = vmatprep.mubr.f32.mxu0 0.0
  %437 = vmatmul.mubr.f32.gmra.mrb[0].mxu0 %v50
  %v438 = vpop.f32.mrb[0].mxu0
  %v439 = vadd.f32 %v176, %v438
  %v440 = vpop.f32.mrb[0].mxu0
  %441 = vmatprep.mubr.f32.mxu0 0.0
  %442 = vmatmul.mubr.f32.gmra.mrb[0].mxu0 %v51
  %v443 = vpop.f32.mrb[0].mxu0
  %v444 = vadd.f32 %v176, %v443
  %v445 = vpop.f32.mrb[0].mxu0
  %446 = vmatprep.mubr.f32.mxu0 0.0
  %447 = vmatmul.mubr.f32.gmra.mrb[0].mxu0 %v52
  %v448 = vpop.f32.mrb[0].mxu0
  %v449 = vadd.f32 %v176, %v448
  %v450 = vpop.f32.mrb[0].mxu0
  %451 = vmatprep.mubr.f32.mxu0 0.0
  %452 = vmatmul.mubr.f32.gmra.mrb[0].mxu0 %v53
  %v453 = vpop.f32.mrb[0].mxu0
  %v454 = vadd.f32 %v176, %v453
  %v455 = vpop.f32.mrb[0].mxu0
  %456 = vmatprep.mubr.f32.mxu0 0.0
  %457 = vmatmul.mubr.f32.gmra.mrb[0].mxu0 %v54
  %v458 = vpop.f32.mrb[0].mxu0
  %v459 = vadd.f32 %v176, %v458
  %v460 = vpop.f32.mrb[0].mxu0
  %461 = vmatprep.mubr.f32.mxu0 0.0
  %462 = vmatmul.mubr.f32.gmra.mrb[0].mxu0 %v55
  %v463 = vpop.f32.mrb[0].mxu0
  %v464 = vadd.f32 %v176, %v463
  %v465 = vpop.f32.mrb[0].mxu0
  %466 = vmatprep.mubr.f32.mxu0 0.0
  %467 = vmatmul.mubr.f32.gmra.mrb[0].mxu0 %v56
  %v468 = vpop.f32.mrb[0].mxu0
  %v469 = vadd.f32 %v176, %v468
  %v470 = vpop.f32.mrb[0].mxu0
  %471 = vmatprep.mubr.f32.mxu0 0.0
  %472 = vmatmul.mubr.f32.gmra.mrb[0].mxu0 %v57
  %v473 = vpop.f32.mrb[0].mxu0
  %v474 = vadd.f32 %v176, %v473
  %v475 = vpop.f32.mrb[0].mxu0
  %476 = vmatprep.mubr.f32.mxu0 0.0
  %477 = vmatmul.mubr.f32.gmra.mrb[0].mxu0 %v58
  %v478 = vpop.f32.mrb[0].mxu0
  %v479 = vadd.f32 %v176, %v478
  %v480 = vpop.f32.mrb[0].mxu0
  %481 = vmatprep.mubr.f32.mxu0 0.0
  %482 = vmatmul.mubr.f32.gmra.mrb[0].mxu0 %v59
  %v483 = vpop.f32.mrb[0].mxu0
  %v484 = vadd.f32 %v176, %v483
  %v485 = vpop.f32.mrb[0].mxu0
  %486 = vmatprep.mubr.f32.mxu0 0.0
  %487 = vmatmul.mubr.f32.gmra.mrb[0].mxu0 %v60
  %v488 = vpop.f32.mrb[0].mxu0
  %v489 = vadd.f32 %v176, %v488
  %v490 = vpop.f32.mrb[0].mxu0
  %491 = vmatprep.mubr.f32.mxu0 0.0
  %492 = vmatmul.mubr.f32.gmra.mrb[0].mxu0 %v61
  %v493 = vpop.f32.mrb[0].mxu0
  %v494 = vadd.f32 %v176, %v493
  %v495 = vpop.f32.mrb[0].mxu0
  %496 = vmatprep.mubr.f32.mxu0 0.0
  %497 = vmatmul.mubr.f32.gmra.mrb[0].mxu0 %v62
  %v498 = vpop.f32.mrb[0].mxu0
  %v499 = vadd.f32 %v176, %v498
  %v500 = vpop.f32.mrb[0].mxu0
  %501 = vmatprep.mubr.f32.mxu0 0.0
  %502 = vmatmul.mubr.f32.gmra.mrb[0].mxu0 %v63
  %v503 = vpop.f32.mrb[0].mxu0
  %v504 = vadd.f32 %v176, %v503
  %v505 = vpop.f32.mrb[0].mxu0
  %506 = vmatprep.mubr.f32.mxu0 0.0
  %507 = vmatmul.mubr.f32.gmra.mrb[0].mxu0 %v64
  %v508 = vpop.f32.mrb[0].mxu0
  %v509 = vadd.f32 %v176, %v508
  %v510 = vpop.f32.mrb[0].mxu0
  %511 = vmatprep.mubr.f32.mxu0 0.0
  %512 = vmatmul.mubr.f32.gmra.mrb[0].mxu0 %v65
  %v513 = vpop.f32.mrb[0].mxu0
  %v514 = vadd.f32 %v176, %v513
  %v515 = vpop.f32.mrb[0].mxu0
  %516 = vmatprep.mubr.f32.mxu0 0.0
  %517 = vmatmul.mubr.f32.gmra.mrb[0].mxu0 %v66
  %v518 = vpop.f32.mrb[0].mxu0
  %v519 = vadd.f32 %v176, %v518
  %v520 = vpop.f32.mrb[0].mxu0
  %521 = vmatprep.mubr.f32.mxu0 0.0
  %522 = vmatmul.mubr.f32.gmra.mrb[0].mxu0 %v67
  %v523 = vpop.f32.mrb[0].mxu0
  %v524 = vadd.f32 %v176, %v523
  %v525 = vpop.f32.mrb[0].mxu0
  %526 = vmatprep.mubr.f32.mxu0 0.0
  %527 = vmatmul.mubr.f32.gmra.mrb[0].mxu0 %v68
  %v528 = vpop.f32.mrb[0].mxu0
  %v529 = vadd.f32 %v176, %v528
  %v530 = vpop.f32.mrb[0].mxu0
  %531 = vmatprep.mubr.f32.mxu0 0.0
  %532 = vmatmul.mubr.f32.gmra.mrb[0].mxu0 %v69
  %v533 = vpop.f32.mrb[0].mxu0
  %v534 = vadd.f32 %v176, %v533
  %v535 = vpop.f32.mrb[0].mxu0
  %536 = vmatprep.mubr.f32.mxu0 0.0
  %537 = vmatmul.mubr.f32.gmra.mrb[0].mxu0 %v70
  %v538 = vpop.f32.mrb[0].mxu0
  %v539 = vadd.f32 %v176, %v538
  %v540 = vpop.f32.mrb[0].mxu0
  %541 = vmatprep.mubr.f32.mxu0 0.0
  %542 = vmatmul.mubr.f32.gmra.mrb[0].mxu0 %v71
  %v543 = vpop.f32.mrb[0].mxu0
  %v544 = vadd.f32 %v176, %v543
  %v545 = vpop.f32.mrb[0].mxu0
  %546 = vmatprep.mubr.f32.mxu0 0.0
  %547 = vmatmul.mubr.f32.gmra.mrb[0].mxu0 %v72
  %v548 = vpop.f32.mrb[0].mxu0
  %v549 = vadd.f32 %v176, %v548
  %v550 = vpop.f32.mrb[0].mxu0
  %551 = vmatprep.mubr.f32.mxu0 0.0
  %552 = vmatmul.mubr.f32.gmra.mrb[0].mxu0 %v73
  %v553 = vpop.f32.mrb[0].mxu0
  %v554 = vadd.f32 %v176, %v553
  %v555 = vpop.f32.mrb[0].mxu0
  %556 = vmatprep.mubr.f32.mxu0 0.0
  %557 = vmatmul.mubr.f32.gmra.mrb[0].mxu0 %v74
  %v558 = vpop.f32.mrb[0].mxu0
  %v559 = vadd.f32 %v176, %v558
  %v560 = vpop.f32.mrb[0].mxu0
  %561 = vmatprep.mubr.f32.mxu0 0.0
  %562 = vmatmul.mubr.f32.gmra.mrb[0].mxu0 %v75
  %v563 = vpop.f32.mrb[0].mxu0
  %v564 = vadd.f32 %v176, %v563
  %v565 = vpop.f32.mrb[0].mxu0
  %566 = vmatprep.mubr.f32.mxu0 0.0
  %567 = vmatmul.mubr.f32.gmra.mrb[0].mxu0 %v76
  %v568 = vpop.f32.mrb[0].mxu0
  %v569 = vadd.f32 %v176, %v568
  %v570 = vpop.f32.mrb[0].mxu0
  %571 = vmatprep.mubr.f32.mxu0 0.0
  %572 = vmatmul.mubr.f32.gmra.mrb[0].mxu0 %v77
  %v573 = vpop.f32.mrb[0].mxu0
  %v574 = vadd.f32 %v176, %v573
  %v575 = vpop.f32.mrb[0].mxu0
  %576 = vmatprep.mubr.f32.mxu0 0.0
  %577 = vmatmul.mubr.f32.gmra.mrb[0].mxu0 %v78
  %v578 = vpop.f32.mrb[0].mxu0
  %v579 = vadd.f32 %v176, %v578
  %v580 = vpop.f32.mrb[0].mxu0
  %581 = vmatprep.mubr.f32.mxu0 0.0
  %582 = vmatmul.mubr.f32.gmra.mrb[0].mxu0 %v79
  %v583 = vpop.f32.mrb[0].mxu0
  %v584 = vadd.f32 %v176, %v583
  %v585 = vpop.f32.mrb[0].mxu0
  %586 = vmatprep.mubr.f32.mxu0 0.0
  %587 = vmatmul.mubr.f32.gmra.mrb[0].mxu0 %v80
  %v588 = vpop.f32.mrb[0].mxu0
  %v589 = vadd.f32 %v176, %v588
  %v590 = vpop.f32.mrb[0].mxu0
  %591 = vmatprep.mubr.f32.mxu0 0.0
  %592 = vmatmul.mubr.f32.gmra.mrb[0].mxu0 %v81
  %v593 = vpop.f32.mrb[0].mxu0
  %v594 = vadd.f32 %v176, %v593
  %v595 = vpop.f32.mrb[0].mxu0
  %596 = vmatprep.mubr.f32.mxu0 0.0
  %597 = vmatmul.mubr.f32.gmra.mrb[0].mxu0 %v82
  %v598 = vpop.f32.mrb[0].mxu0
  %v599 = vadd.f32 %v176, %v598
  %v600 = vpop.f32.mrb[0].mxu0
  %601 = vmatprep.mubr.f32.mxu0 0.0
  %602 = vmatmul.mubr.f32.gmra.mrb[0].mxu0 %v83
  %v603 = vpop.f32.mrb[0].mxu0
  %v604 = vadd.f32 %v176, %v603
  %v605 = vpop.f32.mrb[0].mxu0
  %606 = vmatprep.mubr.f32.mxu0 0.0
  %607 = vmatmul.mubr.f32.gmra.mrb[0].mxu0 %v84
  %v608 = vpop.f32.mrb[0].mxu0
  %v609 = vadd.f32 %v176, %v608
  %v610 = vpop.f32.mrb[0].mxu0
  %611 = vmatprep.mubr.f32.mxu0 0.0
  %612 = vmatmul.mubr.f32.gmra.mrb[0].mxu0 %v85
  %v613 = vpop.f32.mrb[0].mxu0
  %v614 = vadd.f32 %v176, %v613
  %v615 = vpop.f32.mrb[0].mxu0
  %616 = vmatprep.mubr.f32.mxu0 0.0
  %617 = vmatmul.mubr.f32.gmra.mrb[0].mxu0 %v86
  %v618 = vpop.f32.mrb[0].mxu0
  %v619 = vadd.f32 %v176, %v618
  %v620 = vpop.f32.mrb[0].mxu0
  %621 = vmatprep.mubr.f32.mxu0 0.0
  %622 = vmatmul.mubr.f32.gmra.mrb[0].mxu0 %v87
  %v623 = vpop.f32.mrb[0].mxu0
  %v624 = vadd.f32 %v176, %v623
  %v625 = vpop.f32.mrb[0].mxu0
  %626 = vmatprep.mubr.f32.mxu0 0.0
  %627 = vmatmul.mubr.f32.gmra.mrb[0].mxu0 %v88
  %v628 = vpop.f32.mrb[0].mxu0
  %v629 = vadd.f32 %v176, %v628
  %v630 = vpop.f32.mrb[0].mxu0
  %631 = vmatprep.mubr.f32.mxu0 0.0
  %632 = vmatmul.mubr.f32.gmra.mrb[0].mxu0 %v89
  %v633 = vpop.f32.mrb[0].mxu0
  %v634 = vadd.f32 %v176, %v633
  %v635 = vpop.f32.mrb[0].mxu0
  %636 = vmatprep.mubr.f32.mxu0 0.0
  %637 = vmatmul.mubr.f32.gmra.mrb[0].mxu0 %v90
  %v638 = vpop.f32.mrb[0].mxu0
  %v639 = vadd.f32 %v176, %v638
  %v640 = vpop.f32.mrb[0].mxu0
  %641 = vmatprep.mubr.f32.mxu0 0.0
  %642 = vmatmul.mubr.f32.gmra.mrb[0].mxu0 %v91
  %v643 = vpop.f32.mrb[0].mxu0
  %v644 = vadd.f32 %v176, %v643
  %v645 = vpop.f32.mrb[0].mxu0
  %646 = vmatprep.mubr.f32.mxu0 0.0
  %647 = vmatmul.mubr.f32.gmra.mrb[0].mxu0 %v92
  %v648 = vpop.f32.mrb[0].mxu0
  %v649 = vadd.f32 %v176, %v648
  %v650 = vpop.f32.mrb[0].mxu0
  %651 = vmatprep.mubr.f32.mxu0 0.0
  %652 = vmatmul.mubr.f32.gmra.mrb[0].mxu0 %v93
  %v653 = vpop.f32.mrb[0].mxu0
  %v654 = vadd.f32 %v176, %v653
  %v655 = vpop.f32.mrb[0].mxu0
  %656 = vmatprep.mubr.f32.mxu0 0.0
  %657 = vmatmul.mubr.f32.gmra.mrb[0].mxu0 %v94
  %v658 = vpop.f32.mrb[0].mxu0
  %v659 = vadd.f32 %v176, %v658
  %v660 = vpop.f32.mrb[0].mxu0
  %661 = vmatprep.mubr.f32.mxu0 0.0
  %662 = vmatmul.mubr.f32.gmra.mrb[0].mxu0 %v95
  %v663 = vpop.f32.mrb[0].mxu0
  %v664 = vadd.f32 %v176, %v663
  %v665 = vpop.f32.mrb[0].mxu0
  %666 = vmatprep.mubr.f32.mxu0 0.0
  %667 = vmatmul.mubr.f32.gmra.mrb[0].mxu0 %v96
  %v668 = vpop.f32.mrb[0].mxu0
  %v669 = vadd.f32 %v176, %v668
  %v670 = vpop.f32.mrb[0].mxu0
  %671 = vmatprep.mubr.f32.mxu0 0.0
  %672 = vmatmul.mubr.f32.gmra.mrb[0].mxu0 %v97
  %v673 = vpop.f32.mrb[0].mxu0
  %v674 = vadd.f32 %v176, %v673
  %v675 = vpop.f32.mrb[0].mxu0
  %676 = vmatprep.mubr.f32.mxu0 0.0
  %677 = vmatmul.mubr.f32.gmra.mrb[0].mxu0 %v98
  %v678 = vpop.f32.mrb[0].mxu0
  %v679 = vadd.f32 %v176, %v678
  %v680 = vpop.f32.mrb[0].mxu0
  %681 = vmatprep.mubr.f32.mxu0 0.0
  %682 = vmatmul.mubr.f32.gmra.mrb[0].mxu0 %v99
  %v683 = vpop.f32.mrb[0].mxu0
  %v684 = vadd.f32 %v176, %v683
  %v685 = vpop.f32.mrb[0].mxu0
  %686 = vmatprep.mubr.f32.mxu0 0.0
  %687 = vmatmul.mubr.f32.gmra.mrb[0].mxu0 %v100
  %v688 = vpop.f32.mrb[0].mxu0
  %v689 = vadd.f32 %v176, %v688
  %v690 = vpop.f32.mrb[0].mxu0
  %691 = vmatprep.mubr.f32.mxu0 0.0
  %692 = vmatmul.mubr.f32.gmra.mrb[0].mxu0 %v101
  %v693 = vpop.f32.mrb[0].mxu0
  %v694 = vadd.f32 %v176, %v693
  %v695 = vpop.f32.mrb[0].mxu0
  %696 = vmatprep.mubr.f32.mxu0 0.0
  %697 = vmatmul.mubr.f32.gmra.mrb[0].mxu0 %v102
  %v698 = vpop.f32.mrb[0].mxu0
  %v699 = vadd.f32 %v176, %v698
  %v700 = vpop.f32.mrb[0].mxu0
  %701 = vmatprep.mubr.f32.mxu0 0.0
  %702 = vmatmul.mubr.f32.gmra.mrb[0].mxu0 %v103
  %v703 = vpop.f32.mrb[0].mxu0
  %v704 = vadd.f32 %v176, %v703
  %v705 = vpop.f32.mrb[0].mxu0
  %706 = vmatprep.mubr.f32.mxu0 0.0
  %707 = vmatmul.mubr.f32.gmra.mrb[0].mxu0 %v104
  %v708 = vpop.f32.mrb[0].mxu0
  %v709 = vadd.f32 %v176, %v708
  %v710 = vpop.f32.mrb[0].mxu0
  %711 = vmatprep.mubr.f32.mxu0 0.0
  %712 = vmatmul.mubr.f32.gmra.mrb[0].mxu0 %v105
  %v713 = vpop.f32.mrb[0].mxu0
  %v714 = vadd.f32 %v176, %v713
  %v715 = vpop.f32.mrb[0].mxu0
  %716 = vmatprep.mubr.f32.mxu0 0.0
  %717 = vmatmul.mubr.f32.gmra.mrb[0].mxu0 %v106
  %v718 = vpop.f32.mrb[0].mxu0
  %v719 = vadd.f32 %v176, %v718
  %v720 = vpop.f32.mrb[0].mxu0
  %721 = vmatprep.mubr.f32.mxu0 0.0
  %722 = vmatmul.mubr.f32.gmra.mrb[0].mxu0 %v107
  %v723 = vpop.f32.mrb[0].mxu0
  %v724 = vadd.f32 %v176, %v723
  %v725 = vpop.f32.mrb[0].mxu0
  %726 = vmatprep.mubr.f32.mxu0 0.0
  %727 = vmatmul.mubr.f32.gmra.mrb[0].mxu0 %v108
  %v728 = vpop.f32.mrb[0].mxu0
  %v729 = vadd.f32 %v176, %v728
  %v730 = vpop.f32.mrb[0].mxu0
  %731 = vmatprep.mubr.f32.mxu0 0.0
  %732 = vmatmul.mubr.f32.gmra.mrb[0].mxu0 %v109
  %v733 = vpop.f32.mrb[0].mxu0
  %v734 = vadd.f32 %v176, %v733
  %v735 = vpop.f32.mrb[0].mxu0
  %736 = vmatprep.mubr.f32.mxu0 0.0
  %737 = vmatmul.mubr.f32.gmra.mrb[0].mxu0 %v110
  %v738 = vpop.f32.mrb[0].mxu0
  %v739 = vadd.f32 %v176, %v738
  %v740 = vpop.f32.mrb[0].mxu0
  %741 = vmatprep.mubr.f32.mxu0 0.0
  %742 = vmatmul.mubr.f32.gmra.mrb[0].mxu0 %v111
  %v743 = vpop.f32.mrb[0].mxu0
  %v744 = vadd.f32 %v176, %v743
  %v745 = vpop.f32.mrb[0].mxu0
  %746 = vmatprep.mubr.f32.mxu0 0.0
  %747 = vmatmul.mubr.f32.gmra.mrb[0].mxu0 %v112
  %v748 = vpop.f32.mrb[0].mxu0
  %v749 = vadd.f32 %v176, %v748
  %v750 = vpop.f32.mrb[0].mxu0
  %751 = vmatprep.mubr.f32.mxu0 0.0
  %752 = vmatmul.mubr.f32.gmra.mrb[0].mxu0 %v113
  %v753 = vpop.f32.mrb[0].mxu0
  %v754 = vadd.f32 %v176, %v753
  %v755 = vpop.f32.mrb[0].mxu0
  %756 = vmatprep.mubr.f32.mxu0 0.0
  %757 = vmatmul.mubr.f32.gmra.mrb[0].mxu0 %v114
  %v758 = vpop.f32.mrb[0].mxu0
  %v759 = vadd.f32 %v176, %v758
  %v760 = vpop.f32.mrb[0].mxu0
  %761 = vmatprep.mubr.f32.mxu0 0.0
  %762 = vmatmul.mubr.f32.gmra.mrb[0].mxu0 %v115
  %v763 = vpop.f32.mrb[0].mxu0
  %v764 = vadd.f32 %v176, %v763
  %v765 = vpop.f32.mrb[0].mxu0
  %766 = vmatprep.mubr.f32.mxu0 0.0
  %767 = vmatmul.mubr.f32.gmra.mrb[0].mxu0 %v116
  %v768 = vpop.f32.mrb[0].mxu0
  %v769 = vadd.f32 %v176, %v768
  %v770 = vpop.f32.mrb[0].mxu0
  %771 = vmatprep.mubr.f32.mxu0 0.0
  %772 = vmatmul.mubr.f32.gmra.mrb[0].mxu0 %v117
  %v773 = vpop.f32.mrb[0].mxu0
  %v774 = vadd.f32 %v176, %v773
  %v775 = vpop.f32.mrb[0].mxu0
  %776 = vmatprep.mubr.f32.mxu0 0.0
  %777 = vmatmul.mubr.f32.gmra.mrb[0].mxu0 %v118
  %v778 = vpop.f32.mrb[0].mxu0
  %v779 = vadd.f32 %v176, %v778
  %v780 = vpop.f32.mrb[0].mxu0
  %781 = vmatprep.mubr.f32.mxu0 0.0
  %782 = vmatmul.mubr.f32.gmra.mrb[0].mxu0 %v119
  %v783 = vpop.f32.mrb[0].mxu0
  %v784 = vadd.f32 %v176, %v783
  %v785 = vpop.f32.mrb[0].mxu0
  %786 = vmatprep.mubr.f32.mxu0 0.0
  %787 = vmatmul.mubr.f32.gmra.mrb[0].mxu0 %v120
  %v788 = vpop.f32.mrb[0].mxu0
  %v789 = vadd.f32 %v176, %v788
  %v790 = vpop.f32.mrb[0].mxu0
  %791 = vmatprep.mubr.f32.mxu0 0.0
  %792 = vmatmul.mubr.f32.gmra.mrb[0].mxu0 %v121
  %v793 = vpop.f32.mrb[0].mxu0
  %v794 = vadd.f32 %v176, %v793
  %v795 = vpop.f32.mrb[0].mxu0
  %796 = vmatprep.mubr.f32.mxu0 0.0
  %797 = vmatmul.mubr.f32.gmra.mrb[0].mxu0 %v122
  %v798 = vpop.f32.mrb[0].mxu0
  %v799 = vadd.f32 %v176, %v798
  %v800 = vpop.f32.mrb[0].mxu0
  %801 = vmatprep.mubr.f32.mxu0 0.0
  %802 = vmatmul.mubr.f32.gmra.mrb[0].mxu0 %v123
  %v803 = vpop.f32.mrb[0].mxu0
  %v804 = vadd.f32 %v176, %v803
  %v805 = vpop.f32.mrb[0].mxu0
  %806 = vmatprep.mubr.f32.mxu0 0.0
  %807 = vmatmul.mubr.f32.gmra.mrb[0].mxu0 %v124
  %v808 = vpop.f32.mrb[0].mxu0
  %v809 = vadd.f32 %v176, %v808
  %v810 = vpop.f32.mrb[0].mxu0
  %811 = vmatprep.mubr.f32.mxu0 0.0
  %812 = vmatmul.mubr.f32.gmra.mrb[0].mxu0 %v125
  %v813 = vpop.f32.mrb[0].mxu0
  %v814 = vadd.f32 %v176, %v813
  %v815 = vpop.f32.mrb[0].mxu0
  %816 = vmatprep.mubr.f32.mxu0 0.0
  %817 = vmatmul.mubr.f32.gmra.mrb[0].mxu0 %v126
  %v818 = vpop.f32.mrb[0].mxu0
  %v819 = vadd.f32 %v176, %v818
  %v820 = vpop.f32.mrb[0].mxu0
  %821 = vmatprep.mubr.f32.mxu0 0.0
  %822 = vmatmul.mubr.f32.gmra.mrb[0].mxu0 %v127
  %v823 = vpop.f32.mrb[0].mxu0
  %v824 = vadd.f32 %v176, %v823
  %v825 = vpop.f32.mrb[0].mxu0
  %826 = vmatprep.mubr.f32.mxu0 0.0
  %827 = vmatmul.mubr.f32.gmra.mrb[0].mxu0 %v128
  %v828 = vpop.f32.mrb[0].mxu0
  %v829 = vadd.f32 %v176, %v828
  %v830 = vpop.f32.mrb[0].mxu0
  %831 = vmatprep.mubr.f32.mxu0 0.0
  %832 = vmatmul.mubr.f32.gmra.mrb[0].mxu0 %v129
  %v833 = vpop.f32.mrb[0].mxu0
  %v834 = vadd.f32 %v176, %v833
  %v835 = vpop.f32.mrb[0].mxu0
  %836 = vmatprep.mubr.f32.mxu0 0.0
  %837 = vmatmul.mubr.f32.gmra.mrb[0].mxu0 %v130
  %v838 = vpop.f32.mrb[0].mxu0
  %v839 = vadd.f32 %v176, %v838
  %v840 = vpop.f32.mrb[0].mxu0
  %841 = vmatprep.mubr.f32.mxu0 0.0
  %842 = vmatmul.mubr.f32.gmra.mrb[0].mxu0 %v131
  %v843 = vpop.f32.mrb[0].mxu0
  %v844 = vadd.f32 %v176, %v843
  %v845 = vpop.f32.mrb[0].mxu0
  %846 = vmatprep.mubr.f32.mxu0 0.0
  %847 = vmatmul.mubr.f32.gmra.mrb[0].mxu0 %v132
  %v848 = vpop.f32.mrb[0].mxu0
  %v849 = vadd.f32 %v176, %v848
  %v850 = vpop.f32.mrb[0].mxu0
  %851 = vmatprep.mubr.f32.mxu0 0.0
  %852 = vmatmul.mubr.f32.gmra.mrb[0].mxu0 %v133
  %v853 = vpop.f32.mrb[0].mxu0
  %v854 = vadd.f32 %v176, %v853
  %v855 = vpop.f32.mrb[0].mxu0
  %856 = vmatprep.mubr.f32.mxu0 0.0
  %857 = vmatmul.mubr.f32.gmra.mrb[0].mxu0 %v134
  %v858 = vpop.f32.mrb[0].mxu0
  %v859 = vadd.f32 %v176, %v858
  %v860 = vpop.f32.mrb[0].mxu0
  %861 = vmatprep.mubr.f32.mxu0 0.0
  %862 = vmatmul.mubr.f32.gmra.mrb[0].mxu0 %v135
  %v863 = vpop.f32.mrb[0].mxu0
  %v864 = vadd.f32 %v176, %v863
  %v865 = vpop.f32.mrb[0].mxu0
  %866 = vmatprep.mubr.f32.mxu0 0.0
  %867 = vmatmul.mubr.f32.gmra.mrb[0].mxu0 %v136
  %v868 = vpop.f32.mrb[0].mxu0
  %v869 = vadd.f32 %v176, %v868
  %v870 = vpop.f32.mrb[0].mxu0
  %871 = vmatprep.mubr.f32.mxu0 0.0
  %872 = vmatmul.mubr.f32.gmra.mrb[0].mxu0 %v137
  %v873 = vpop.f32.mrb[0].mxu0
  %v874 = vadd.f32 %v176, %v873
  %v875 = vpop.f32.mrb[0].mxu0
  %876 = vmatprep.mubr.f32.mxu0 0.0
  %877 = vmatmul.mubr.f32.gmra.mrb[0].mxu0 %v138
  %v878 = vpop.f32.mrb[0].mxu0
  %v879 = vadd.f32 %v176, %v878
  %v880 = vpop.f32.mrb[0].mxu0
  %881 = vdwg.mxu0
  %v882 = vmax.f32 %v244, 0.0
  %v883 = vmax.f32 %v249, 0.0
  %v884 = vmax.f32 %v254, 0.0
  %v885 = vmax.f32 %v259, 0.0
  %v886 = vmax.f32 %v264, 0.0
  %v887 = vmax.f32 %v269, 0.0
  %v888 = vmax.f32 %v274, 0.0
  %v889 = vmax.f32 %v279, 0.0
  %v890 = vmax.f32 %v284, 0.0
  %v891 = vmax.f32 %v289, 0.0
  %v892 = vmax.f32 %v294, 0.0
  %v893 = vmax.f32 %v299, 0.0
  %v894 = vmax.f32 %v304, 0.0
  %v895 = vmax.f32 %v309, 0.0
  %v896 = vmax.f32 %v314, 0.0
  %v897 = vmax.f32 %v319, 0.0
  %v898 = vmax.f32 %v324, 0.0
  %v899 = vmax.f32 %v329, 0.0
  %v900 = vmax.f32 %v334, 0.0
  %v901 = vmax.f32 %v339, 0.0
  %v902 = vmax.f32 %v344, 0.0
  %v903 = vmax.f32 %v349, 0.0
  %v904 = vmax.f32 %v354, 0.0
  %v905 = vmax.f32 %v359, 0.0
  %v906 = vmax.f32 %v364, 0.0
  %v907 = vmax.f32 %v369, 0.0
  %v908 = vmax.f32 %v374, 0.0
  %v909 = vmax.f32 %v379, 0.0
  %v910 = vmax.f32 %v384, 0.0
  %v911 = vmax.f32 %v389, 0.0
  %v912 = vmax.f32 %v394, 0.0
  %v913 = vmax.f32 %v399, 0.0
  %v914 = vmax.f32 %v404, 0.0
  %v915 = vmax.f32 %v409, 0.0
  %v916 = vmax.f32 %v414, 0.0
  %v917 = vmax.f32 %v419, 0.0
  %v918 = vmax.f32 %v424, 0.0
  %v919 = vmax.f32 %v429, 0.0
  %v920 = vmax.f32 %v434, 0.0
  %v921 = vmax.f32 %v439, 0.0
  %v922 = vmax.f32 %v444, 0.0
  %v923 = vmax.f32 %v449, 0.0
  %v924 = vmax.f32 %v454, 0.0
  %v925 = vmax.f32 %v459, 0.0
  %v926 = vmax.f32 %v464, 0.0
  %v927 = vmax.f32 %v469, 0.0
  %v928 = vmax.f32 %v474, 0.0
  %v929 = vmax.f32 %v479, 0.0
  %v930 = vmax.f32 %v484, 0.0
  %v931 = vmax.f32 %v489, 0.0
  %v932 = vmax.f32 %v494, 0.0
  %v933 = vmax.f32 %v499, 0.0
  %v934 = vmax.f32 %v504, 0.0
  %v935 = vmax.f32 %v509, 0.0
  %v936 = vmax.f32 %v514, 0.0
  %v937 = vmax.f32 %v519, 0.0
  %v938 = vmax.f32 %v524, 0.0
  %v939 = vmax.f32 %v529, 0.0
  %v940 = vmax.f32 %v534, 0.0
  %v941 = vmax.f32 %v539, 0.0
  %v942 = vmax.f32 %v544, 0.0
  %v943 = vmax.f32 %v549, 0.0
  %v944 = vmax.f32 %v554, 0.0
  %v945 = vmax.f32 %v559, 0.0
  %v946 = vmax.f32 %v564, 0.0
  %v947 = vmax.f32 %v569, 0.0
  %v948 = vmax.f32 %v574, 0.0
  %v949 = vmax.f32 %v579, 0.0
  %v950 = vmax.f32 %v584, 0.0
  %v951 = vmax.f32 %v589, 0.0
  %v952 = vmax.f32 %v594, 0.0
  %v953 = vmax.f32 %v599, 0.0
  %v954 = vmax.f32 %v604, 0.0
  %v955 = vmax.f32 %v609, 0.0
  %v956 = vmax.f32 %v614, 0.0
  %v957 = vmax.f32 %v619, 0.0
  %v958 = vmax.f32 %v624, 0.0
  %v959 = vmax.f32 %v629, 0.0
  %v960 = vmax.f32 %v634, 0.0
  %v961 = vmax.f32 %v639, 0.0
  %v962 = vmax.f32 %v644, 0.0
  %v963 = vmax.f32 %v649, 0.0
  %v964 = vmax.f32 %v654, 0.0
  %v965 = vmax.f32 %v659, 0.0
  %v966 = vmax.f32 %v664, 0.0
  %v967 = vmax.f32 %v669, 0.0
  %v968 = vmax.f32 %v674, 0.0
  %v969 = vmax.f32 %v679, 0.0
  %v970 = vmax.f32 %v684, 0.0
  %v971 = vmax.f32 %v689, 0.0
  %v972 = vmax.f32 %v694, 0.0
  %v973 = vmax.f32 %v699, 0.0
  %v974 = vmax.f32 %v704, 0.0
  %v975 = vmax.f32 %v709, 0.0
  %v976 = vmax.f32 %v714, 0.0
  %v977 = vmax.f32 %v719, 0.0
  %v978 = vmax.f32 %v724, 0.0
  %v979 = vmax.f32 %v729, 0.0
  %v980 = vmax.f32 %v734, 0.0
  %v981 = vmax.f32 %v739, 0.0
  %v982 = vmax.f32 %v744, 0.0
  %v983 = vmax.f32 %v749, 0.0
  %v984 = vmax.f32 %v754, 0.0
  %v985 = vmax.f32 %v759, 0.0
  %v986 = vmax.f32 %v764, 0.0
  %v987 = vmax.f32 %v769, 0.0
  %v988 = vmax.f32 %v774, 0.0
  %v989 = vmax.f32 %v779, 0.0
  %v990 = vmax.f32 %v784, 0.0
  %v991 = vmax.f32 %v789, 0.0
  %v992 = vmax.f32 %v794, 0.0
  %v993 = vmax.f32 %v799, 0.0
  %v994 = vmax.f32 %v804, 0.0
  %v995 = vmax.f32 %v809, 0.0
  %v996 = vmax.f32 %v814, 0.0
  %v997 = vmax.f32 %v819, 0.0
  %v998 = vmax.f32 %v824, 0.0
  %v999 = vmax.f32 %v829, 0.0
  %v1000 = vmax.f32 %v834, 0.0
  %v1001 = vmax.f32 %v839, 0.0
  %v1002 = vmax.f32 %v844, 0.0
  %v1003 = vmax.f32 %v849, 0.0
  %v1004 = vmax.f32 %v854, 0.0
  %v1005 = vmax.f32 %v859, 0.0
  %v1006 = vmax.f32 %v864, 0.0
  %v1007 = vmax.f32 %v869, 0.0
  %v1008 = vmax.f32 %v874, 0.0
  %v1009 = vmax.f32 %v879, 0.0
  %v1010 = vadd.f32 %v882, %v883
  %v1011 = vadd.f32 %v1010, %v884
  %v1012 = vadd.f32 %v1011, %v885
  %v1013 = vadd.f32 %v1012, %v886
  %v1014 = vadd.f32 %v1013, %v887
  %v1015 = vadd.f32 %v1014, %v888
  %v1016 = vadd.f32 %v1015, %v889
  %v1017 = vadd.f32 %v1016, %v890
  %v1018 = vadd.f32 %v1017, %v891
  %v1019 = vadd.f32 %v1018, %v892
  %v1020 = vadd.f32 %v1019, %v893
  %v1021 = vadd.f32 %v1020, %v894
  %v1022 = vadd.f32 %v1021, %v895
  %v1023 = vadd.f32 %v1022, %v896
  %v1024 = vadd.f32 %v1023, %v897
  %v1025 = vadd.f32 %v1024, %v898
  %v1026 = vadd.f32 %v1025, %v899
  %v1027 = vadd.f32 %v1026, %v900
  %v1028 = vadd.f32 %v1027, %v901
  %v1029 = vadd.f32 %v1028, %v902
  %v1030 = vadd.f32 %v1029, %v903
  %v1031 = vadd.f32 %v1030, %v904
  %v1032 = vadd.f32 %v1031, %v905
  %v1033 = vadd.f32 %v1032, %v906
  %v1034 = vadd.f32 %v1033, %v907
  %v1035 = vadd.f32 %v1034, %v908
  %v1036 = vadd.f32 %v1035, %v909
  %v1037 = vadd.f32 %v1036, %v910
  %v1038 = vadd.f32 %v1037, %v911
  %v1039 = vadd.f32 %v1038, %v912
  %v1040 = vadd.f32 %v1039, %v913
  %v1041 = vrot.slane %v1040, 4
  %v1042 = vadd.f32 %v1040, %v1041
  %v1043 = vrot.slane %v1042, 2
  %v1044 = vadd.f32 %v1042, %v1043
  %v1045 = vrot.slane %v1044, 1
  %v1046 = vadd.f32 %v1044, %v1045
  %v1047 = vadd.f32 %v914, %v915
  %v1048 = vadd.f32 %v1047, %v916
  %v1049 = vadd.f32 %v1048, %v917
  %v1050 = vadd.f32 %v1049, %v918
  %v1051 = vadd.f32 %v1050, %v919
  %v1052 = vadd.f32 %v1051, %v920
  %v1053 = vadd.f32 %v1052, %v921
  %v1054 = vadd.f32 %v1053, %v922
  %v1055 = vadd.f32 %v1054, %v923
  %v1056 = vadd.f32 %v1055, %v924
  %v1057 = vadd.f32 %v1056, %v925
  %v1058 = vadd.f32 %v1057, %v926
  %v1059 = vadd.f32 %v1058, %v927
  %v1060 = vadd.f32 %v1059, %v928
  %v1061 = vadd.f32 %v1060, %v929
  %v1062 = vadd.f32 %v1061, %v930
  %v1063 = vadd.f32 %v1062, %v931
  %v1064 = vadd.f32 %v1063, %v932
  %v1065 = vadd.f32 %v1064, %v933
  %v1066 = vadd.f32 %v1065, %v934
  %v1067 = vadd.f32 %v1066, %v935
  %v1068 = vadd.f32 %v1067, %v936
  %v1069 = vadd.f32 %v1068, %v937
  %v1070 = vadd.f32 %v1069, %v938
  %v1071 = vadd.f32 %v1070, %v939
  %v1072 = vadd.f32 %v1071, %v940
  %v1073 = vadd.f32 %v1072, %v941
  %v1074 = vadd.f32 %v1073, %v942
  %v1075 = vadd.f32 %v1074, %v943
  %v1076 = vadd.f32 %v1075, %v944
  %v1077 = vadd.f32 %v1076, %v945
  %v1078 = vrot.slane %v1077, 4
  %v1079 = vadd.f32 %v1077, %v1078
  %v1080 = vrot.slane %v1079, 2
  %v1081 = vadd.f32 %v1079, %v1080
  %v1082 = vrot.slane %v1081, 1
  %v1083 = vadd.f32 %v1081, %v1082
  %v1084 = vadd.f32 %v946, %v947
  %v1085 = vadd.f32 %v1084, %v948
  %v1086 = vadd.f32 %v1085, %v949
  %v1087 = vadd.f32 %v1086, %v950
  %v1088 = vadd.f32 %v1087, %v951
  %v1089 = vadd.f32 %v1088, %v952
  %v1090 = vadd.f32 %v1089, %v953
  %v1091 = vadd.f32 %v1090, %v954
  %v1092 = vadd.f32 %v1091, %v955
  %v1093 = vadd.f32 %v1092, %v956
  %v1094 = vadd.f32 %v1093, %v957
  %v1095 = vadd.f32 %v1094, %v958
  %v1096 = vadd.f32 %v1095, %v959
  %v1097 = vadd.f32 %v1096, %v960
  %v1098 = vadd.f32 %v1097, %v961
  %v1099 = vadd.f32 %v1098, %v962
  %v1100 = vadd.f32 %v1099, %v963
  %v1101 = vadd.f32 %v1100, %v964
  %v1102 = vadd.f32 %v1101, %v965
  %v1103 = vadd.f32 %v1102, %v966
  %v1104 = vadd.f32 %v1103, %v967
  %v1105 = vadd.f32 %v1104, %v968
  %v1106 = vadd.f32 %v1105, %v969
  %v1107 = vadd.f32 %v1106, %v970
  %v1108 = vadd.f32 %v1107, %v971
  %v1109 = vadd.f32 %v1108, %v972
  %v1110 = vadd.f32 %v1109, %v973
  %v1111 = vadd.f32 %v1110, %v974
  %v1112 = vadd.f32 %v1111, %v975
  %v1113 = vadd.f32 %v1112, %v976
  %v1114 = vadd.f32 %v1113, %v977
  %v1115 = vrot.slane %v1114, 4
  %v1116 = vadd.f32 %v1114, %v1115
  %v1117 = vrot.slane %v1116, 2
  %v1118 = vadd.f32 %v1116, %v1117
  %v1119 = vrot.slane %v1118, 1
  %v1120 = vadd.f32 %v1118, %v1119
  %v1121 = vadd.f32 %v978, %v979
  %v1122 = vadd.f32 %v1121, %v980
  %v1123 = vadd.f32 %v1122, %v981
  %v1124 = vadd.f32 %v1123, %v982
  %v1125 = vadd.f32 %v1124, %v983
  %v1126 = vadd.f32 %v1125, %v984
  %v1127 = vadd.f32 %v1126, %v985
  %v1128 = vadd.f32 %v1127, %v986
  %v1129 = vadd.f32 %v1128, %v987
  %v1130 = vadd.f32 %v1129, %v988
  %v1131 = vadd.f32 %v1130, %v989
  %v1132 = vadd.f32 %v1131, %v990
  %v1133 = vadd.f32 %v1132, %v991
  %v1134 = vadd.f32 %v1133, %v992
  %v1135 = vadd.f32 %v1134, %v993
  %v1136 = vadd.f32 %v1135, %v994
  %v1137 = vadd.f32 %v1136, %v995
  %v1138 = vadd.f32 %v1137, %v996
  %v1139 = vadd.f32 %v1138, %v997
  %v1140 = vadd.f32 %v1139, %v998
  %v1141 = vadd.f32 %v1140, %v999
  %v1142 = vadd.f32 %v1141, %v1000
  %v1143 = vadd.f32 %v1142, %v1001
  %v1144 = vadd.f32 %v1143, %v1002
  %v1145 = vadd.f32 %v1144, %v1003
  %v1146 = vadd.f32 %v1145, %v1004
  %v1147 = vadd.f32 %v1146, %v1005
  %v1148 = vadd.f32 %v1147, %v1006
  %v1149 = vadd.f32 %v1148, %v1007
  %v1150 = vadd.f32 %v1149, %v1008
  %v1151 = vadd.f32 %v1150, %v1009
  %v1152 = vrot.slane %v1151, 4
  %v1153 = vadd.f32 %v1151, %v1152
  %v1154 = vrot.slane %v1153, 2
  %v1155 = vadd.f32 %v1153, %v1154
  %v1156 = vrot.slane %v1155, 1
  %v1157 = vadd.f32 %v1155, %v1156
  %v1158 = vlaneseq
  %v1159 = vshrl.u32 %v1158, 7
  %v1160 = vsub.s32 0, %v1159
  %v1161 = vrot.slane %v172, %v1160
  %vm1166 = vcmask 1041409
  %v1167 = vsel %vm1166, %v1083, %v1046
  %vm1168 = vcmask 1042434
  %v1169 = vsel %vm1168, %v1120, %v1167
  %vm1170 = vcmask 1043459
  %v1171 = vsel %vm1170, %v1157, %v1169
  %1173 = vmatprep.subr.mxu0 0.0
  %1174 = vmatpush1.msra.mxu0 %v156
  %1175 = vmatprep.subr.mxu0 0.0
  %1176 = vmatpush1.msra.mxu0 %v157
  %1177 = vmatprep.subr.mxu0 0.0
  %1178 = vmatpush1.msra.mxu0 %v158
  %1179 = vmatprep.subr.mxu0 0.0
  %1180 = vmatpush1.msra.mxu0 %v159
  %1181 = vmatprep.subr.mxu0 0.0
  %1182 = vmatpush1.msra.mxu0 %v160
  %1183 = vmatprep.subr.mxu0 0.0
  %1184 = vmatpush1.msra.mxu0 %v161
  %1185 = vmatprep.subr.mxu0 0.0
  %1186 = vmatpush1.msra.mxu0 %v162
  %1187 = vmatprep.subr.mxu0 0.0
  %1188 = vmatpush1.msra.mxu0 %v163
  %1189 = vmatprep.subr.mxu0 0.0
  %1190 = vmatpush1.msra.mxu0 %v164
  %1191 = vmatprep.subr.mxu0 0.0
  %1192 = vmatpush1.msra.mxu0 %v165
  %1193 = vmatprep.subr.mxu0 0.0
  %1194 = vmatpush1.msra.mxu0 %v166
  %1195 = vmatprep.subr.mxu0 0.0
  %1196 = vmatpush1.msra.mxu0 %v167
  %1197 = vmatprep.subr.mxu0 0.0
  %1198 = vmatpush1.msra.mxu0 %v168
  %1199 = vmatprep.subr.mxu0 0.0
  %1200 = vmatpush1.msra.mxu0 %v169
  %1201 = vmatprep.subr.mxu0 0.0
  %1202 = vmatpush1.msra.mxu0 %v170
  %1203 = vmatprep.subr.mxu0 0.0
  %1204 = vmatpush1.msra.mxu0 %v171
  %1205 = vmatprep.subr.mxu0 0.0
  %1206 = vmatpush1.msra.mxu0 0.0
  %1207 = vmatprep.subr.mxu0 0.0
  %1208 = vmatpush1.msra.mxu0 0.0
  %1209 = vmatprep.subr.mxu0 0.0
  %1210 = vmatpush1.msra.mxu0 0.0
  %1211 = vmatprep.subr.mxu0 0.0
  %1212 = vmatpush1.msra.mxu0 0.0
  %1213 = vmatprep.subr.mxu0 0.0
  %1214 = vmatpush1.msra.mxu0 0.0
  %1215 = vmatprep.subr.mxu0 0.0
  %1216 = vmatpush1.msra.mxu0 0.0
  %1217 = vmatprep.subr.mxu0 0.0
  %1218 = vmatpush1.msra.mxu0 0.0
  %1219 = vmatprep.subr.mxu0 0.0
  %1220 = vmatpush1.msra.mxu0 0.0
  %1221 = vmatprep.subr.mxu0 0.0
  %1222 = vmatpush1.msra.mxu0 0.0
  %1223 = vmatprep.subr.mxu0 0.0
  %1224 = vmatpush1.msra.mxu0 0.0
  %1225 = vmatprep.subr.mxu0 0.0
  %1226 = vmatpush1.msra.mxu0 0.0
  %1227 = vmatprep.subr.mxu0 0.0
  %1228 = vmatpush1.msra.mxu0 0.0
  %1229 = vmatprep.subr.mxu0 0.0
  %1230 = vmatpush1.msra.mxu0 0.0
  %1231 = vmatprep.subr.mxu0 0.0
  %1232 = vmatpush1.msra.mxu0 0.0
  %1233 = vmatprep.subr.mxu0 0.0
  %1234 = vmatpush1.msra.mxu0 0.0
  %1235 = vmatprep.subr.mxu0 0.0
  %1236 = vmatpush1.msra.mxu0 0.0
  %1237 = vmatprep.mubr.f32.mxu0 0.0
  %1238 = vmatmul.mubr.f32.gmra.mrb[0].mxu0 %v1171
  %v1239 = vpop.f32.mrb[0].mxu0
  %v1240 = vadd.f32 %v1161, %v1239
  %v1241 = vpop.f32.mrb[0].mxu0
  %1242 = vdwg.mxu0
  %v1243 = vmul.f32 %v1240, %v1240
  %vm1244 = vcmask 1043456
  %v1245 = vsel %vm1244, %v1243, 0.0
  %1246 = vadd.xlane.f32.xlu0 %v1245
  %v1247 = vpop.xlane.xlu0 %1246
  %v1248 = vrsqrt.pop %v1247
  %v1249 = vmul.f32 %v1247, %v1248
  %vm1250 = vcmp.eq.f32.partialorder %v1247, inf
  %v1251 = vsel %vm1250, %v1247, %v1249
  %vm1252 = vcmp.eq.f32.partialorder %v1247, 0.0
  %v1253 = vand.u32 %v1247, 2147483648
  %v1254 = vsel %vm1252, %v1253, %v1251
  %v1255 = vadd.f32 %v1254, 1e-06
  %v1256 = vrcp.pop %v1255
  %v1257 = vmul.f32 %v1240, %v1256
  %1258 = vst [vmem:[%s2] sm:$0xf] %v1257
  // Predicated region
  $region10: #{_siamese_forward_impl.1} parent=0 // pred_check
    _
  $region11: #{_siamese_forward_impl.1} parent=0 // pred_check_branch
    %1260 = sbr.rel (0) target = $region13
  $region12: #{_siamese_forward_impl.1} parent=0 // pred_region
    _
  $region13: #{_siamese_forward_impl.1} parent=0 // pred_fallthru
    _
  // Predicated region
  $region14: #{_siamese_forward_impl.1} parent=0 // pred_check
    _
  $region15: #{_siamese_forward_impl.1} parent=0 // pred_check_branch
    %1262 = sbr.rel (0) target = $region17
  $region16: #{_siamese_forward_impl.1} parent=0 // pred_region
    _
  $region17: #{_siamese_forward_impl.1} parent=0 // pred_fallthru
    _

</llo_original>
